<compile_context>
chip_gen: v7x
topology: tpu7x:2x2x1
jax: 0.10.0
libtpu: 0.0.40
codegen_flags: <defaults>
</compile_context>

<pallas_src>
import jax
import jax.numpy as jnp
from jax.experimental import pallas as pl
from jax.experimental.pallas import tpu as pltpu

_PYR_TAPS = (1.0, 4.0, 6.0, 4.0, 1.0)  # outer(taps, taps)/256 == kornia's 5x5 kernel


# ----------------------------------------------------------------------------
# Wrapper-side construction of the fused (pad + blur + downsample) matrices.
# ----------------------------------------------------------------------------
def _pad_matrix(size: int, pad: int, mode: str) -> jnp.ndarray:
    """R: (size + 2*pad, size), x_padded = R @ x along this axis."""
    idx = jnp.arange(-pad, size + pad)
    if mode == "reflect":
        src = jnp.abs(idx)
        src = jnp.where(src >= size, 2 * (size - 1) - src, src)
    elif mode == "replicate":
        src = jnp.clip(idx, 0, size - 1)
    elif mode == "circular":
        src = jnp.mod(idx, size)
    elif mode == "constant":
        src = jnp.clip(idx, 0, size - 1)
    else:
        raise ValueError(f"unsupported border_type: {mode}")
    R = (src[:, None] == jnp.arange(size)[None, :]).astype(jnp.float32)
    if mode == "constant":
        valid = ((idx >= 0) & (idx < size)).astype(jnp.float32)
        R = R * valid[:, None]
    return R


def _blur_matrix(size: int) -> jnp.ndarray:
    """C: (size, size + 4), row r holds [1,4,6,4,1]/16 at columns r..r+4."""
    taps = jnp.asarray(_PYR_TAPS, jnp.float32) / 16.0
    d = jnp.arange(size + 4)[None, :] - jnp.arange(size)[:, None]
    return jnp.where((d >= 0) & (d <= 4), taps[jnp.clip(d, 0, 4)], 0.0)


def _interp_matrix(in_size: int, out_size: int, align_corners: bool) -> jnp.ndarray:
    """D: (out_size, in_size), 1-D bilinear resize (matches F.interpolate)."""
    o = jnp.arange(out_size, dtype=jnp.float32)
    if align_corners:
        scale = (in_size - 1) / (out_size - 1) if out_size > 1 else 0.0
        src = o * scale
    else:
        src = (o + 0.5) * (in_size / out_size) - 0.5
        src = jnp.clip(src, 0.0, float(in_size - 1))
    i0 = jnp.clip(jnp.floor(src).astype(jnp.int32), 0, in_size - 1)
    i1 = jnp.minimum(i0 + 1, in_size - 1)
    w1 = src - i0.astype(jnp.float32)
    rows = jnp.arange(out_size)
    D = jnp.zeros((out_size, in_size), jnp.float32)
    D = D.at[rows, i0].add(1.0 - w1)
    D = D.at[rows, i1].add(w1)
    return D


# ----------------------------------------------------------------------------
# Pallas kernel: out[n] = A @ x[n] @ B for a batch of TN planes.
# ----------------------------------------------------------------------------
def _make_pyrdown_kernel(tn: int, H: int, W: int, Ho: int, Wo: int, compute_dtype):
    def kernel(x_ref, at_ref, b_ref, o_ref):
        x = x_ref[...]                                            # (tn, H, W)

        # Column pass: one MXU-filling matmul, M = tn*H rows.
        t = jnp.dot(x.reshape(tn * H, W), b_ref[...],
                    preferred_element_type=jnp.float32)           # (tn*H, Wo) f32

        # Row pass: swap the minor dims (XLU) and run ONE matmul with
        # M = tn*Wo rows against the shared (H, Ho) matrix.  No per-plane
        # batched matmuls, no broadcast copy of A in VMEM.
        tt = jnp.swapaxes(t.reshape(tn, H, Wo), 1, 2)             # (tn, Wo, H) f32
        tt = tt.astype(compute_dtype)                             # bf16 path if input bf16
        out_t = jnp.dot(tt.reshape(tn * Wo, H), at_ref[...],
                        preferred_element_type=jnp.float32)       # (tn*Wo, Ho) f32

        # Minor-dim swap back to (tn, Ho, Wo) so the stored layout matches
        # the (N, Ho, Wo) output (no wrapper-side transpose pass over HBM).
        o_ref[...] = jnp.swapaxes(out_t.reshape(tn, Wo, Ho), 1, 2).astype(o_ref.dtype)

    return kernel


def pyr_down(x, border_type: str = "reflect", align_corners: bool = False):
    """PyrDown forward: (B, C, H, W) -> (B, C, H//2, W//2)."""
    Bsz, C, H, W = x.shape
    if H < 3 or W < 3:
        raise ValueError("PyrDown needs H, W >= 3 for a 2-pixel reflect pad.")
    Ho, Wo = H // 2, W // 2
    N = Bsz * C

    orig_dtype = x.dtype
    if x.dtype != jnp.float32 and x.dtype != jnp.bfloat16:
        # Non-float inputs are computed in f32 and cast back (kornia expects float).
        x = x.astype(jnp.float32)
    compute_dtype = jnp.bfloat16 if x.dtype == jnp.bfloat16 else jnp.float32

    # Fused (pad -> separable 5-tap blur -> bilinear x0.5) band matrices.
    A_mat = (_interp_matrix(H, Ho, align_corners)
             @ _blur_matrix(H)
             @ _pad_matrix(H, 2, border_type))                    # (Ho, H) f32
    B_mat = (_interp_matrix(W, Wo, align_corners)
             @ _blur_matrix(W)
             @ _pad_matrix(W, 2, border_type)).T                  # (W, Wo) f32
    A_T = A_mat.T.astype(compute_dtype)                           # (H, Ho)
    B_mat = B_mat.astype(compute_dtype)                           # both on bf16 MXU path for bf16 x

    xf = x.reshape(N, H, W)

    # ---- VMEM sizing -------------------------------------------------------
    # Budget = 3/4 of physical VMEM (v5e/v6e 128 MiB, v7x 64 MiB), leaving
    # headroom for Mosaic internal scratch.  No extra //2 fudge; A^T/B blocks
    # are counted explicitly (double-buffered allocation even though their
    # constant index maps mean they are not re-DMA'd each grid step).
    try:
        vmem_phys = pltpu.get_tpu_info().vmem_capacity_bytes
    except Exception:
        vmem_phys = 128 * 1024 * 1024
    vmem_limit = int(vmem_phys * 3 // 4)

    x_item = jnp.dtype(x.dtype).itemsize
    c_item = jnp.dtype(compute_dtype).itemsize
    per_plane = (2 * (H * W + Ho * Wo) * x_item          # double-buffered in/out blocks
                 + H * Wo * 4 + H * Wo * c_item          # column-pass result + swapped/cast copy
                 + Wo * Ho * 4 + Ho * Wo * 4)            # row-pass result + transposed store temp
    fixed = 2 * (H * Ho + W * Wo) * c_item + (4 << 20)   # A^T/B double buffers + compiler slack

    cap = max(1, (vmem_limit - fixed) // per_plane)
    # Keep >= 2 grid steps so the single "parallel" axis can be split across
    # TensorCores on multi-TC parts (v7x).  tn no longer has to divide N:
    # Pallas pads the last (partial) block and drops out-of-range writes;
    # planes are independent, so padding garbage cannot contaminate outputs.
    tn = int(max(1, min(cap, pl.cdiv(N, 2), N)))
    grid = (pl.cdiv(N, tn),)

    out = pl.pallas_call(
        _make_pyrdown_kernel(tn, H, W, Ho, Wo, compute_dtype),
        out_shape=jax.ShapeDtypeStruct((N, Ho, Wo), x.dtype),
        grid_spec=pltpu.PrefetchScalarGridSpec(
            num_scalar_prefetch=0,
            grid=grid,
            in_specs=[
                pl.BlockSpec((tn, H, W), lambda n: (n, 0, 0)),
                pl.BlockSpec((H, Ho), lambda n: (0, 0)),
                pl.BlockSpec((W, Wo), lambda n: (0, 0)),
            ],
            out_specs=pl.BlockSpec((tn, Ho, Wo), lambda n: (n, 0, 0)),
        ),
        compiler_params=pltpu.CompilerParams(
            dimension_semantics=("parallel",),
            vmem_limit_bytes=vmem_limit,
        ),
    )(xf, A_T, B_mat)

    out = out.reshape(Bsz, C, Ho, Wo)
    if out.dtype != orig_dtype:
        out = out.astype(orig_dtype)
    return out
    # TODO(synk): for Wo < 128 a lane-dense output (packing planes along the
    # lane axis) would avoid masked vst.msk stores, at the cost of an extra
    # wrapper-side transpose pass over HBM; not applied here.


# ----------------------------------------------------------------------------
# Independent pure-JAX reference (explicit pad + 25-tap blur + 2x2 mean).
# ----------------------------------------------------------------------------
def _pyr_down_ref(x):
    B, C, H, W = x.shape
    xp = jnp.pad(x, ((0, 0), (0, 0), (2, 2), (2, 2)), mode="reflect")
    taps = jnp.asarray(_PYR_TAPS, jnp.float32)
    k = jnp.outer(taps, taps) / 256.0
    blur = jnp.zeros(x.shape, jnp.float32)
    for di in range(5):
        for dj in range(5):
            blur = blur + k[di, dj] * xp[:, :, di:di + H, dj:dj + W].astype(jnp.float32)
    return blur.reshape(B, C, H // 2, 2, W // 2, 2).mean(axis=(3, 5)).astype(x.dtype)


if __name__ == "__main__":
    key = jax.random.PRNGKey(0)
    x = jax.random.uniform(key, (2, 4, 16, 16), dtype=jnp.float32)

    out = jax.block_until_ready(pyr_down(x))
    assert out.shape == (2, 4, 8, 8), out.shape

    ref = _pyr_down_ref(x)
    err = float(jnp.max(jnp.abs(out - ref)))
    assert jnp.allclose(out, ref, atol=1e-5, rtol=1e-5), err

    print("KERNEL_OK")
</pallas_src>

<mosaic_0001>
module attributes {stable_mosaic.version = 11 : i64} {
  func.func @kernel(%arg0: i32, %arg1: memref<4x16x16xf32, #tpu.memory_space<vmem>>, %arg2: memref<16x8xf32, #tpu.memory_space<vmem>>, %arg3: memref<16x8xf32, #tpu.memory_space<vmem>>, %arg4: memref<4x8x8xf32, #tpu.memory_space<vmem>>) attributes {dimension_semantics = [#tpu.dimension_semantics<parallel>], iteration_bounds = array<i64: 2>, scalar_prefetch = 0 : i64, scratch_operands = 0 : i64, tpu.core_type = #tpu.core_type<tc>, window_params = [{transform_indices = @transform_0, window_bounds = array<i64: 4, 16, 16>}, {pipeline_mode = #tpu.pipeline_mode<synchronous>, transform_indices = @transform_1, window_bounds = array<i64: 16, 8>}, {pipeline_mode = #tpu.pipeline_mode<synchronous>, transform_indices = @transform_2, window_bounds = array<i64: 16, 8>}, {transform_indices = @transform_3, window_bounds = array<i64: 4, 8, 8>}]} {
    %c0 = arith.constant 0 : index
    %c0_0 = arith.constant 0 : index
    %c0_1 = arith.constant 0 : index
    %0 = vector.load %arg1[%c0, %c0_0, %c0_1] : memref<4x16x16xf32, #tpu.memory_space<vmem>>, vector<4x16x16xf32>
    %1 = vector.shape_cast %0 : vector<4x16x16xf32> to vector<64x16xf32>
    %c0_2 = arith.constant 0 : index
    %c0_3 = arith.constant 0 : index
    %2 = vector.load %arg3[%c0_2, %c0_3] : memref<16x8xf32, #tpu.memory_space<vmem>>, vector<16x8xf32>
    %cst = arith.constant dense<0.000000e+00> : vector<64x8xf32>
    %3 = tpu.matmul %1, %2, %cst {dimension_numbers = #tpu.dot_dimension_numbers<[1], [0], [0], [1], [0, 0, 1, 1], [], []>} : vector<64x16xf32>, vector<16x8xf32>, vector<64x8xf32> -> vector<64x8xf32>
    %4 = vector.shape_cast %3 : vector<64x8xf32> to vector<4x16x8xf32>
    %5 = tpu.transpose %4, [0, 2, 1] : vector<4x16x8xf32> -> vector<4x8x16xf32>
    %6 = vector.shape_cast %5 : vector<4x8x16xf32> to vector<32x16xf32>
    %c0_4 = arith.constant 0 : index
    %c0_5 = arith.constant 0 : index
    %7 = vector.load %arg2[%c0_4, %c0_5] : memref<16x8xf32, #tpu.memory_space<vmem>>, vector<16x8xf32>
    %cst_6 = arith.constant dense<0.000000e+00> : vector<32x8xf32>
    %8 = tpu.matmul %6, %7, %cst_6 {dimension_numbers = #tpu.dot_dimension_numbers<[1], [0], [0], [1], [0, 0, 1, 1], [], []>} : vector<32x16xf32>, vector<16x8xf32>, vector<32x8xf32> -> vector<32x8xf32>
    %9 = vector.shape_cast %8 : vector<32x8xf32> to vector<4x8x8xf32>
    %10 = tpu.transpose %9, [0, 2, 1] : vector<4x8x8xf32> -> vector<4x8x8xf32>
    %c0_7 = arith.constant 0 : index
    %c0_8 = arith.constant 0 : index
    %c0_9 = arith.constant 0 : index
    %11 = vector.load %arg4[%c0_7, %c0_8, %c0_9] : memref<4x8x8xf32, #tpu.memory_space<vmem>>, vector<4x8x8xf32>
    tpu.vector_store %arg4[%c0_7, %c0_8, %c0_9], %10 {strides = array<i32>} : memref<4x8x8xf32, #tpu.memory_space<vmem>>, vector<4x8x8xf32>,
    return
  }
  func.func @transform_0(%arg0: i32) -> (i32, i32, i32) {
    %c0_i32 = arith.constant 0 : i32
    %c0_i32_0 = arith.constant 0 : i32
    %c0_i32_1 = arith.constant 0 : i32
    return %arg0, %c0_i32, %c0_i32_0 : i32, i32, i32
  }
  func.func @transform_1(%arg0: i32) -> (i32, i32) {
    %c0_i32 = arith.constant 0 : i32
    %c0_i32_0 = arith.constant 0 : i32
    %c0_i32_1 = arith.constant 0 : i32
    return %c0_i32, %c0_i32_0 : i32, i32
  }
  func.func @transform_2(%arg0: i32) -> (i32, i32) {
    %c0_i32 = arith.constant 0 : i32
    %c0_i32_0 = arith.constant 0 : i32
    %c0_i32_1 = arith.constant 0 : i32
    return %c0_i32, %c0_i32_0 : i32, i32
  }
  func.func @transform_3(%arg0: i32) -> (i32, i32, i32) {
    %c0_i32 = arith.constant 0 : i32
    %c0_i32_0 = arith.constant 0 : i32
    %c0_i32_1 = arith.constant 0 : i32
    return %arg0, %c0_i32, %c0_i32_0 : i32, i32, i32
  }
}

</mosaic_0001>

<llo_original>
// kernel: tpu_custom_call.1
$region0: #{tpu_custom_call.1}
  #allocation0 [shape = 'u32[]', space=smem, size = 0x4, offset = 0x4, fixed_abs, tag = 'smem constant byte address 0x4 - core index']
  #allocation1 [shape = 'u32[144,128]{1,0:T(1,128)}', space=vmem, size = 0x12000, scoped, tag = 'internal scratch']
  %s0 = inlined_call_operand.hbm [shape: f32[8,16,16], index: 0, kind: input, shape index: {}]
  %s1 = inlined_call_operand.hbm [shape: f32[16,8], index: 1, kind: input, shape index: {}]
  %s2 = inlined_call_operand.hbm [shape: f32[16,8], index: 2, kind: input, shape index: {}]
  %s3 = inlined_call_operand.hbm [shape: f32[8,8,8], index: 3, kind: output, shape index: {}]
  %s4 = sld [smem:[#allocation0]]
  $region57: #{tpu_custom_call.1} parent=0
    _
  %s6 = ssub.s32 1, %s4
  %s7 = scalar_select 0, %s6, %s4
  $region1: #{tpu_custom_call.1} parent=0
    #allocation2 [shape = 'u8[65536]{0}', space=vmem, size = 0x10000, scoped, tag = 'input window, operand 0']
    #allocation3 [shape = 's32[2]{0}', space=sflag, size = 0x8, scoped, tag = 'scoped memory for tpu_custom_call.1']
    #allocation4 [shape = 's32[2]{0}', space=sflag, size = 0x8, scoped, tag = 'scoped memory for tpu_custom_call.1']
    #allocation5 [shape = 'u8[8192]{0}', space=vmem, size = 0x2000, scoped, tag = 'input window, operand 1, single buffered']
    #allocation6 [shape = 's32[1]{0}', space=sflag, size = 0x4, scoped, tag = 'scoped memory for tpu_custom_call.1']
    #allocation7 [shape = 'u8[8192]{0}', space=vmem, size = 0x2000, scoped, tag = 'input window, operand 2, single buffered']
    #allocation8 [shape = 'u8[32768]{0}', space=vmem, size = 0x8000, scoped, tag = 'output window, operand 0']
    %8 = vsyncpa [#allocation3], 0
    %s9 = scalar_lea.sflag [#allocation3], 1
    %10 = vsyncpa %s9, 0
    %11 = vsyncpa [#allocation6], 0
    %12 = vsyncpa [#allocation4], 0
    %s13 = scalar_lea.sflag [#allocation4], 1
    %14 = vsyncpa %s13, 0
    loop: start=0, step=1, limit=4
    $region2: #{tpu_custom_call.1} parent=1 // loop_pre_header
      _
    $region3: #{tpu_custom_call.1} parent=1 // loop_header
      %s16 = sphi 0, %s20
      %p17 = scmp.ge.s32.totalorder %s16, 4
      %s26 = sphi 0, %s28
      %s29 = sphi 0, %s26
      %s30 = sphi 0, %s29
      %s46 = sphi 0, %s30
      %s50 = sphi 0, %s50
      %s52 = sphi 0, %s50
      %s53 = sphi 0, %s52
      %s67 = sphi 0, %s53
      %s71 = sphi 0, %s71
      %s73 = sphi 0, %s71
      %s74 = sphi 0, %s73
      %s88 = sphi 0, %s74
      %s94 = sphi 0, %s96
      %s97 = sphi 0, %s94
      %s98 = sphi 0, %s97
      %s114 = sphi 0, %s98
    $region4: #{tpu_custom_call.1} parent=1 // loop_header_branch
      %19 = sbr.rel (%p17) target = $region8
    $region5: #{tpu_custom_call.1} parent=1 // loop_body
      %s21 = ssub.s32 %s16, 1
      %s22 = ssub.s32 %s16, 2
      %s23 = sadd.s32 %s16, 1
      %s24 = ssub.s32 %s16, %s23
      %p25 = scmp.eq.s32.totalorder %s24, 0
      %s27 = sadd.s32 %s26, 1
      %s28 = scalar_select %p25, %s26, %s27
      %p31 = pneg %p25
      %p32 = scmp.eq.s32.totalorder %s16, 1
      %p33 = por %p31, %p32
      %p34 = scmp.ne.s32.totalorder %s26, %s29
      %p35 = scmp.eq.s32.totalorder %s16, 0
      %p36 = por %p34, %p35
      %p37 = scmp.ne.s32.totalorder %s26, %s29
      %p38 = scmp.eq.s32.totalorder %s21, 1
      %p39 = por %p37, %p38
      %p40 = scmp.ne.s32.totalorder %s29, %s30
      %p41 = scmp.eq.s32.totalorder %s21, 0
      %p42 = por %p40, %p41
      %p43 = scmp.ne.s32.totalorder %s29, %s30
      %p44 = scmp.eq.s32.totalorder %s22, 1
      %p45 = por %p43, %p44
      %p47 = scmp.ne.s32.totalorder %s30, %s46
      %p48 = scmp.eq.s32.totalorder %s22, 0
      %p49 = por %p47, %p48
      %s51 = sadd.s32 %s50, 1
      %p54 = scmp.eq.s32.totalorder %s16, 1
      %p55 = scmp.ne.s32.totalorder %s50, %s52
      %p56 = scmp.eq.s32.totalorder %s16, 0
      %p57 = por %p55, %p56
      %p58 = scmp.ne.s32.totalorder %s50, %s52
      %p59 = scmp.eq.s32.totalorder %s21, 1
      %p60 = por %p58, %p59
      %p61 = scmp.ne.s32.totalorder %s52, %s53
      %p62 = scmp.eq.s32.totalorder %s21, 0
      %p63 = por %p61, %p62
      %p64 = scmp.ne.s32.totalorder %s52, %s53
      %p65 = scmp.eq.s32.totalorder %s22, 1
      %p66 = por %p64, %p65
      %p68 = scmp.ne.s32.totalorder %s53, %s67
      %p69 = scmp.eq.s32.totalorder %s22, 0
      %p70 = por %p68, %p69
      %s72 = sadd.s32 %s71, 1
      %p75 = scmp.eq.s32.totalorder %s16, 1
      %p76 = scmp.ne.s32.totalorder %s71, %s73
      %p77 = scmp.eq.s32.totalorder %s16, 0
      %p78 = por %p76, %p77
      %p79 = scmp.ne.s32.totalorder %s71, %s73
      %p80 = scmp.eq.s32.totalorder %s21, 1
      %p81 = por %p79, %p80
      %p82 = scmp.ne.s32.totalorder %s73, %s74
      %p83 = scmp.eq.s32.totalorder %s21, 0
      %p84 = por %p82, %p83
      %p85 = scmp.ne.s32.totalorder %s73, %s74
      %p86 = scmp.eq.s32.totalorder %s22, 1
      %p87 = por %p85, %p86
      %p89 = scmp.ne.s32.totalorder %s74, %s88
      %p90 = scmp.eq.s32.totalorder %s22, 0
      %p91 = por %p89, %p90
      %s92 = ssub.s32 %s16, %s23
      %p93 = scmp.eq.s32.totalorder %s92, 0
      %s95 = sadd.s32 %s94, 1
      %s96 = scalar_select %p93, %s94, %s95
      %p99 = pneg %p93
      %p100 = scmp.eq.s32.totalorder %s16, 1
      %p101 = por %p99, %p100
      %p102 = scmp.ne.s32.totalorder %s94, %s97
      %p103 = scmp.eq.s32.totalorder %s16, 0
      %p104 = por %p102, %p103
      %p105 = scmp.ne.s32.totalorder %s94, %s97
      %p106 = scmp.eq.s32.totalorder %s21, 1
      %p107 = por %p105, %p106
      %p108 = scmp.ne.s32.totalorder %s97, %s98
      %p109 = scmp.eq.s32.totalorder %s21, 0
      %p110 = por %p108, %p109
      %p111 = scmp.ne.s32.totalorder %s97, %s98
      %p112 = scmp.eq.s32.totalorder %s22, 1
      %p113 = por %p111, %p112
      %p115 = scmp.ne.s32.totalorder %s98, %s114
      %p116 = scmp.eq.s32.totalorder %s22, 0
      %p117 = por %p115, %p116
      %p118 = scmp.le.s32.totalorder 1, %s16
      %p119 = scmp.lt.s32.totalorder %s16, 3
      %p120 = pnand %p118, %p119
      %p121 = pneg %p120
      // Predicated region
      $region9: #{tpu_custom_call.1} parent=5 // pred_check
        _
      $region10: #{tpu_custom_call.1} parent=5 // pred_check_branch
        %123 = sbr.rel (%p120) target = $region12
      $region11: #{tpu_custom_call.1} parent=5 // pred_region
        %s124 = ssub.s32 %s16, 1
        // Predicated region
        $region13: #{tpu_custom_call.1} parent=11 // pred_check
          %p125 = pneg %p63
        $region14: #{tpu_custom_call.1} parent=11 // pred_check_branch
          %127 = sbr.rel (%p125) target = $region16
        $region15: #{tpu_custom_call.1} parent=11 // pred_region
          %s129 = ssub.s32 256, 256
          %130 = vsyncadd [#allocation6], %s129
          %s131 = sshll.u32 [#allocation5], 4
          %s132 = int_to_ptr.vmem [resolvable:$true] %s131
          %137 = dma.hbm_to_vmem [thread:$0]  %s1, 256, %s132, [#allocation6], 128, 128, 8
        $region16: #{tpu_custom_call.1} parent=11 // pred_fallthru
          _
        // Predicated region
        $region17: #{tpu_custom_call.1} parent=11 // pred_check
          %p138 = pneg %p84
        $region18: #{tpu_custom_call.1} parent=11 // pred_check_branch
          %140 = sbr.rel (%p138) target = $region20
        $region19: #{tpu_custom_call.1} parent=11 // pred_region
          %s142 = ssub.s32 256, 256
          %143 = vsyncadd [#allocation6], %s142
          %s144 = sshll.u32 [#allocation7], 4
          %s145 = int_to_ptr.vmem [resolvable:$true] %s144
          %150 = dma.hbm_to_vmem [thread:$0]  %s2, 256, %s145, [#allocation6], 128, 128, 8
        $region20: #{tpu_custom_call.1} parent=11 // pred_fallthru
          _
      $region12: #{tpu_custom_call.1} parent=5 // pred_fallthru
        _
      %p151 = scmp.lt.s32.totalorder %s16, 2
      // Predicated region
      $region21: #{tpu_custom_call.1} parent=5 // pred_check
        %p152 = pneg %p151
      $region22: #{tpu_custom_call.1} parent=5 // pred_check_branch
        %154 = sbr.rel (%p152) target = $region24
      $region23: #{tpu_custom_call.1} parent=5 // pred_region
        // Predicated region
        $region25: #{tpu_custom_call.1} parent=23 // pred_check
          %p155 = pneg %p36
        $region26: #{tpu_custom_call.1} parent=23 // pred_check_branch
          %157 = sbr.rel (%p155) target = $region28
        $region27: #{tpu_custom_call.1} parent=23 // pred_region
          %s158 = sand.u32 %s26, 1
          %s159 = scalar_lea.sflag [#allocation3], %s158
          %s160 = sand.u32 %s26, 1
          %s161 = smul.addr %s160, 64
          %s162 = scalar_lea.vmem [#allocation2], %s161
          %s163 = smul.u32 4, %s16
          %s165 = ssub.s32 1024, 1024
          %166 = vsyncadd %s159, %s165
          %s167 = smul.addr %s163, 2
          %s168 = smul.addr %s167, 128
          %s169 = scalar_lea.hbm %s0, %s168
          %s170 = sshll.u32 %s162, 4
          %s171 = int_to_ptr.vmem [resolvable:$true] %s170
          %176 = dma.hbm_to_vmem [thread:$0]  %s169, 1024, %s171, %s159, 128, 128, 8
        $region28: #{tpu_custom_call.1} parent=23 // pred_fallthru
          _
      $region24: #{tpu_custom_call.1} parent=5 // pred_fallthru
        _
      %p177 = scmp.le.s32.totalorder 1, %s16
      %p178 = scmp.lt.s32.totalorder %s16, 3
      %p179 = pnand %p177, %p178
      %p180 = pneg %p179
      // Predicated region
      $region29: #{tpu_custom_call.1} parent=5 // pred_check
        _
      $region30: #{tpu_custom_call.1} parent=5 // pred_check_branch
        %182 = sbr.rel (%p179) target = $region32
      $region31: #{tpu_custom_call.1} parent=5 // pred_region
        %s183 = ssub.s32 %s16, 1
        %s184 = sand.u32 %s29, 1
        %s185 = scalar_lea.sflag [#allocation3], %s184
        %s186 = sand.u32 %s29, 1
        %s187 = smul.addr %s186, 64
        %s188 = scalar_lea.vmem [#allocation2], %s187
        // Predicated region
        $region33: #{tpu_custom_call.1} parent=31 // pred_check
          %p189 = pneg %p42
        $region34: #{tpu_custom_call.1} parent=31 // pred_check_branch
          %191 = sbr.rel (%p189) target = $region36
        $region35: #{tpu_custom_call.1} parent=31 // pred_region
          %192 = dma.done %s185, 1024
        $region36: #{tpu_custom_call.1} parent=31 // pred_fallthru
          _
        // Predicated region
        $region37: #{tpu_custom_call.1} parent=31 // pred_check
          %p193 = pneg %p63
        $region38: #{tpu_custom_call.1} parent=31 // pred_check_branch
          %195 = sbr.rel (%p193) target = $region40
        $region39: #{tpu_custom_call.1} parent=31 // pred_region
          %196 = dma.done [#allocation6], 256
        $region40: #{tpu_custom_call.1} parent=31 // pred_fallthru
          _
        // Predicated region
        $region41: #{tpu_custom_call.1} parent=31 // pred_check
          %p197 = pneg %p84
        $region42: #{tpu_custom_call.1} parent=31 // pred_check_branch
          %199 = sbr.rel (%p197) target = $region44
        $region43: #{tpu_custom_call.1} parent=31 // pred_region
          %200 = dma.done [#allocation6], 256
        $region44: #{tpu_custom_call.1} parent=31 // pred_fallthru
          _
        %s201 = sand.u32 %s29, 1
        %s202 = scalar_lea.sflag [#allocation3], %s201
        %s203 = sand.u32 %s29, 1
        %s204 = smul.addr %s203, 64
        %s205 = scalar_lea.vmem [#allocation2], %s204
        %p206 = pneg %p42
        %p207 = pneg %p39
        %p208 = pneg %p63
        %p209 = pneg %p60
        %p210 = pneg %p84
        %p211 = pneg %p81
        %p212 = pneg %p110
        %p213 = pneg %p107
        %s214 = sand.u32 %s97, 1
        %s215 = scalar_lea.sflag [#allocation4], %s214
        %s216 = sand.u32 %s97, 1
        %s217 = smul.addr %s216, 32
        %s218 = scalar_lea.vmem [#allocation8], %s217
        %s219 = smul.u32 4, %s21
        %s220 = smul.u32 4, %s21
        %v221 = vld [vmem:[%s188] sm:$0xff]
        %v222 = vld [vmem:[%s188 + $0x8] sm:$0xff]
        %v223 = vld [vmem:[%s188 + $0x10] sm:$0xff]
        %v224 = vld [vmem:[%s188 + $0x18] sm:$0xff]
        %v225 = vld [vmem:[%s188 + $0x20] sm:$0xff]
        %v226 = vld [vmem:[%s188 + $0x28] sm:$0xff]
        %v227 = vld [vmem:[%s188 + $0x30] sm:$0xff]
        %v228 = vld [vmem:[%s188 + $0x38] sm:$0xff]
        %v229 = vld [vmem:[#allocation7] sm:$0xff]
        %v230 = vld [vmem:[#allocation7 + $0x8] sm:$0xff]
        %vm231 = vcmask 130048
        %v233 = vsel %vm231, %v221, 0
        %v236 = vsel %vm231, %v222, 0
        %v239 = vsel %vm231, %v223, 0
        %v242 = vsel %vm231, %v224, 0
        %v245 = vsel %vm231, %v225, 0
        %v248 = vsel %vm231, %v226, 0
        %v251 = vsel %vm231, %v227, 0
        %v254 = vsel %vm231, %v228, 0
        %256 = vmatprep.subr.mxu0 0.0
        %257 = vmatpush1.msra.mxu0 %v229
        %258 = vmatprep.subr.mxu0 0.0
        %259 = vmatpush1.msra.mxu0 %v230
        %260 = vmatprep.subr.mxu0 0.0
        %261 = vmatpush1.msra.mxu0 0.0
        %262 = vmatprep.subr.mxu0 0.0
        %263 = vmatpush1.msra.mxu0 0.0
        %264 = vmatprep.subr.mxu0 0.0
        %265 = vmatpush1.msra.mxu0 0.0
        %266 = vmatprep.subr.mxu0 0.0
        %267 = vmatpush1.msra.mxu0 0.0
        %268 = vmatprep.subr.mxu0 0.0
        %269 = vmatpush1.msra.mxu0 0.0
        %270 = vmatprep.subr.mxu0 0.0
        %271 = vmatpush1.msra.mxu0 0.0
        %272 = vmatprep.subr.mxu0 0.0
        %273 = vmatpush1.msra.mxu0 0.0
        %274 = vmatprep.subr.mxu0 0.0
        %275 = vmatpush1.msra.mxu0 0.0
        %276 = vmatprep.subr.mxu0 0.0
        %277 = vmatpush1.msra.mxu0 0.0
        %278 = vmatprep.subr.mxu0 0.0
        %279 = vmatpush1.msra.mxu0 0.0
        %280 = vmatprep.subr.mxu0 0.0
        %281 = vmatpush1.msra.mxu0 0.0
        %282 = vmatprep.subr.mxu0 0.0
        %283 = vmatpush1.msra.mxu0 0.0
        %284 = vmatprep.subr.mxu0 0.0
        %285 = vmatpush1.msra.mxu0 0.0
        %286 = vmatprep.subr.mxu0 0.0
        %287 = vmatpush1.msra.mxu0 0.0
        %288 = vmatprep.subr.mxu0 0.0
        %289 = vmatpush1.msra.mxu0 0.0
        %290 = vmatprep.subr.mxu0 0.0
        %291 = vmatpush1.msra.mxu0 0.0
        %292 = vmatprep.subr.mxu0 0.0
        %293 = vmatpush1.msra.mxu0 0.0
        %294 = vmatprep.subr.mxu0 0.0
        %295 = vmatpush1.msra.mxu0 0.0
        %296 = vmatprep.subr.mxu0 0.0
        %297 = vmatpush1.msra.mxu0 0.0
        %298 = vmatprep.subr.mxu0 0.0
        %299 = vmatpush1.msra.mxu0 0.0
        %300 = vmatprep.subr.mxu0 0.0
        %301 = vmatpush1.msra.mxu0 0.0
        %302 = vmatprep.subr.mxu0 0.0
        %303 = vmatpush1.msra.mxu0 0.0
        %304 = vmatprep.subr.mxu0 0.0
        %305 = vmatpush1.msra.mxu0 0.0
        %306 = vmatprep.subr.mxu0 0.0
        %307 = vmatpush1.msra.mxu0 0.0
        %308 = vmatprep.subr.mxu0 0.0
        %309 = vmatpush1.msra.mxu0 0.0
        %310 = vmatprep.subr.mxu0 0.0
        %311 = vmatpush1.msra.mxu0 0.0
        %312 = vmatprep.subr.mxu0 0.0
        %313 = vmatpush1.msra.mxu0 0.0
        %314 = vmatprep.subr.mxu0 0.0
        %315 = vmatpush1.msra.mxu0 0.0
        %316 = vmatprep.subr.mxu0 0.0
        %317 = vmatpush1.msra.mxu0 0.0
        %318 = vmatprep.subr.mxu0 0.0
        %319 = vmatpush1.msra.mxu0 0.0
        %320 = vmatprep.mubr.f32.mxu0 0.0
        %321 = vmatmul.mubr.f32.gmra.mrb[0].mxu0 %v233
        %v322 = vpop.f32.mrb[0].mxu0
        %v323 = vadd.f32 0.0, %v322
        %v324 = vpop.f32.mrb[0].mxu0
        %325 = vmatprep.mubr.f32.mxu0 0.0
        %326 = vmatmul.mubr.f32.gmra.mrb[0].mxu0 %v236
        %v327 = vpop.f32.mrb[0].mxu0
        %v328 = vadd.f32 0.0, %v327
        %v329 = vpop.f32.mrb[0].mxu0
        %330 = vmatprep.mubr.f32.mxu0 0.0
        %331 = vmatmul.mubr.f32.gmra.mrb[0].mxu0 %v239
        %v332 = vpop.f32.mrb[0].mxu0
        %v333 = vadd.f32 0.0, %v332
        %v334 = vpop.f32.mrb[0].mxu0
        %335 = vmatprep.mubr.f32.mxu0 0.0
        %336 = vmatmul.mubr.f32.gmra.mrb[0].mxu0 %v242
        %v337 = vpop.f32.mrb[0].mxu0
        %v338 = vadd.f32 0.0, %v337
        %v339 = vpop.f32.mrb[0].mxu0
        %340 = vmatprep.mubr.f32.mxu0 0.0
        %341 = vmatmul.mubr.f32.gmra.mrb[0].mxu0 %v245
        %v342 = vpop.f32.mrb[0].mxu0
        %v343 = vadd.f32 0.0, %v342
        %v344 = vpop.f32.mrb[0].mxu0
        %345 = vmatprep.mubr.f32.mxu0 0.0
        %346 = vmatmul.mubr.f32.gmra.mrb[0].mxu0 %v248
        %v347 = vpop.f32.mrb[0].mxu0
        %v348 = vadd.f32 0.0, %v347
        %v349 = vpop.f32.mrb[0].mxu0
        %350 = vmatprep.mubr.f32.mxu0 0.0
        %351 = vmatmul.mubr.f32.gmra.mrb[0].mxu0 %v251
        %v352 = vpop.f32.mrb[0].mxu0
        %v353 = vadd.f32 0.0, %v352
        %v354 = vpop.f32.mrb[0].mxu0
        %355 = vmatprep.mubr.f32.mxu0 0.0
        %356 = vmatmul.mubr.f32.gmra.mrb[0].mxu0 %v254
        %v357 = vpop.f32.mrb[0].mxu0
        %v358 = vadd.f32 0.0, %v357
        %v359 = vpop.f32.mrb[0].mxu0
        %360 = vdwg.mxu0
        %361 = vxpose.xlu0.b32.start [1/16] %v323, 128
        %362 = vxpose.xlu0.b32.cont [2/16] %v328, 128
        %363 = vxpose.xlu0.b32.cont [3/16] 0.0, 128
        %364 = vxpose.xlu0.b32.cont [4/16] 0.0, 128
        %365 = vxpose.xlu0.b32.cont [5/16] 0.0, 128
        %366 = vxpose.xlu0.b32.cont [6/16] 0.0, 128
        %367 = vxpose.xlu0.b32.cont [7/16] 0.0, 128
        %368 = vxpose.xlu0.b32.cont [8/16] 0.0, 128
        %369 = vxpose.xlu0.b32.cont [9/16] 0.0, 128
        %370 = vxpose.xlu0.b32.cont [10/16] 0.0, 128
        %371 = vxpose.xlu0.b32.cont [11/16] 0.0, 128
        %372 = vxpose.xlu0.b32.cont [12/16] 0.0, 128
        %373 = vxpose.xlu0.b32.cont [13/16] 0.0, 128
        %374 = vxpose.xlu0.b32.cont [14/16] 0.0, 128
        %375 = vxpose.xlu0.b32.cont [15/16] 0.0, 128
        %376 = vxpose.xlu0.b32.end [16/16] 0.0, 128
        %v377 = vpop.trf.xlu0
        %v378 = vpop.trf.xlu0
        %v379 = vpop.trf.xlu0
        %v380 = vpop.trf.xlu0
        %v381 = vpop.trf.xlu0
        %v382 = vpop.trf.xlu0
        %v383 = vpop.trf.xlu0
        %v384 = vpop.trf.xlu0
        %v385 = vpop.trf.xlu0
        %v386 = vpop.trf.xlu0
        %v387 = vpop.trf.xlu0
        %v388 = vpop.trf.xlu0
        %v389 = vpop.trf.xlu0
        %v390 = vpop.trf.xlu0
        %v391 = vpop.trf.xlu0
        %v392 = vpop.trf.xlu0
        %393 = vxpose.xlu0.b32.start [1/16] %v333, 128
        %394 = vxpose.xlu0.b32.cont [2/16] %v338, 128
        %395 = vxpose.xlu0.b32.cont [3/16] 0.0, 128
        %396 = vxpose.xlu0.b32.cont [4/16] 0.0, 128
        %397 = vxpose.xlu0.b32.cont [5/16] 0.0, 128
        %398 = vxpose.xlu0.b32.cont [6/16] 0.0, 128
        %399 = vxpose.xlu0.b32.cont [7/16] 0.0, 128
        %400 = vxpose.xlu0.b32.cont [8/16] 0.0, 128
        %401 = vxpose.xlu0.b32.cont [9/16] 0.0, 128
        %402 = vxpose.xlu0.b32.cont [10/16] 0.0, 128
        %403 = vxpose.xlu0.b32.cont [11/16] 0.0, 128
        %404 = vxpose.xlu0.b32.cont [12/16] 0.0, 128
        %405 = vxpose.xlu0.b32.cont [13/16] 0.0, 128
        %406 = vxpose.xlu0.b32.cont [14/16] 0.0, 128
        %407 = vxpose.xlu0.b32.cont [15/16] 0.0, 128
        %408 = vxpose.xlu0.b32.end [16/16] 0.0, 128
        %v409 = vpop.trf.xlu0
        %v410 = vpop.trf.xlu0
        %v411 = vpop.trf.xlu0
        %v412 = vpop.trf.xlu0
        %v413 = vpop.trf.xlu0
        %v414 = vpop.trf.xlu0
        %v415 = vpop.trf.xlu0
        %v416 = vpop.trf.xlu0
        %v417 = vpop.trf.xlu0
        %v418 = vpop.trf.xlu0
        %v419 = vpop.trf.xlu0
        %v420 = vpop.trf.xlu0
        %v421 = vpop.trf.xlu0
        %v422 = vpop.trf.xlu0
        %v423 = vpop.trf.xlu0
        %v424 = vpop.trf.xlu0
        %425 = vxpose.xlu0.b32.start [1/16] %v343, 128
        %426 = vxpose.xlu0.b32.cont [2/16] %v348, 128
        %427 = vxpose.xlu0.b32.cont [3/16] 0.0, 128
        %428 = vxpose.xlu0.b32.cont [4/16] 0.0, 128
        %429 = vxpose.xlu0.b32.cont [5/16] 0.0, 128
        %430 = vxpose.xlu0.b32.cont [6/16] 0.0, 128
        %431 = vxpose.xlu0.b32.cont [7/16] 0.0, 128
        %432 = vxpose.xlu0.b32.cont [8/16] 0.0, 128
        %433 = vxpose.xlu0.b32.cont [9/16] 0.0, 128
        %434 = vxpose.xlu0.b32.cont [10/16] 0.0, 128
        %435 = vxpose.xlu0.b32.cont [11/16] 0.0, 128
        %436 = vxpose.xlu0.b32.cont [12/16] 0.0, 128
        %437 = vxpose.xlu0.b32.cont [13/16] 0.0, 128
        %438 = vxpose.xlu0.b32.cont [14/16] 0.0, 128
        %439 = vxpose.xlu0.b32.cont [15/16] 0.0, 128
        %440 = vxpose.xlu0.b32.end [16/16] 0.0, 128
        %v441 = vpop.trf.xlu0
        %v442 = vpop.trf.xlu0
        %v443 = vpop.trf.xlu0
        %v444 = vpop.trf.xlu0
        %v445 = vpop.trf.xlu0
        %v446 = vpop.trf.xlu0
        %v447 = vpop.trf.xlu0
        %v448 = vpop.trf.xlu0
        %v449 = vpop.trf.xlu0
        %v450 = vpop.trf.xlu0
        %v451 = vpop.trf.xlu0
        %v452 = vpop.trf.xlu0
        %v453 = vpop.trf.xlu0
        %v454 = vpop.trf.xlu0
        %v455 = vpop.trf.xlu0
        %v456 = vpop.trf.xlu0
        %457 = vxpose.xlu0.b32.start [1/16] %v353, 128
        %458 = vxpose.xlu0.b32.cont [2/16] %v358, 128
        %459 = vxpose.xlu0.b32.cont [3/16] 0.0, 128
        %460 = vxpose.xlu0.b32.cont [4/16] 0.0, 128
        %461 = vxpose.xlu0.b32.cont [5/16] 0.0, 128
        %462 = vxpose.xlu0.b32.cont [6/16] 0.0, 128
        %463 = vxpose.xlu0.b32.cont [7/16] 0.0, 128
        %464 = vxpose.xlu0.b32.cont [8/16] 0.0, 128
        %465 = vxpose.xlu0.b32.cont [9/16] 0.0, 128
        %466 = vxpose.xlu0.b32.cont [10/16] 0.0, 128
        %467 = vxpose.xlu0.b32.cont [11/16] 0.0, 128
        %468 = vxpose.xlu0.b32.cont [12/16] 0.0, 128
        %469 = vxpose.xlu0.b32.cont [13/16] 0.0, 128
        %470 = vxpose.xlu0.b32.cont [14/16] 0.0, 128
        %471 = vxpose.xlu0.b32.cont [15/16] 0.0, 128
        %472 = vxpose.xlu0.b32.end [16/16] 0.0, 128
        %v473 = vpop.trf.xlu0
        %v474 = vpop.trf.xlu0
        %v475 = vpop.trf.xlu0
        %v476 = vpop.trf.xlu0
        %v477 = vpop.trf.xlu0
        %v478 = vpop.trf.xlu0
        %v479 = vpop.trf.xlu0
        %v480 = vpop.trf.xlu0
        %v481 = vpop.trf.xlu0
        %v482 = vpop.trf.xlu0
        %v483 = vpop.trf.xlu0
        %v484 = vpop.trf.xlu0
        %v485 = vpop.trf.xlu0
        %v486 = vpop.trf.xlu0
        %v487 = vpop.trf.xlu0
        %v488 = vpop.trf.xlu0
        %v489 = vld [vmem:[#allocation5] sm:$0xff]
        %v490 = vld [vmem:[#allocation5 + $0x8] sm:$0xff]
        %v492 = vsel %vm231, %v377, 0
        %v495 = vsel %vm231, %v409, 0
        %v498 = vsel %vm231, %v441, 0
        %v501 = vsel %vm231, %v473, 0
        %503 = vmatprep.subr.mxu0 0.0
        %504 = vmatpush1.msra.mxu0 %v489
        %505 = vmatprep.subr.mxu0 0.0
        %506 = vmatpush1.msra.mxu0 %v490
        %507 = vmatprep.subr.mxu0 0.0
        %508 = vmatpush1.msra.mxu0 0.0
        %509 = vmatprep.subr.mxu0 0.0
        %510 = vmatpush1.msra.mxu0 0.0
        %511 = vmatprep.subr.mxu0 0.0
        %512 = vmatpush1.msra.mxu0 0.0
        %513 = vmatprep.subr.mxu0 0.0
        %514 = vmatpush1.msra.mxu0 0.0
        %515 = vmatprep.subr.mxu0 0.0
        %516 = vmatpush1.msra.mxu0 0.0
        %517 = vmatprep.subr.mxu0 0.0
        %518 = vmatpush1.msra.mxu0 0.0
        %519 = vmatprep.subr.mxu0 0.0
        %520 = vmatpush1.msra.mxu0 0.0
        %521 = vmatprep.subr.mxu0 0.0
        %522 = vmatpush1.msra.mxu0 0.0
        %523 = vmatprep.subr.mxu0 0.0
        %524 = vmatpush1.msra.mxu0 0.0
        %525 = vmatprep.subr.mxu0 0.0
        %526 = vmatpush1.msra.mxu0 0.0
        %527 = vmatprep.subr.mxu0 0.0
        %528 = vmatpush1.msra.mxu0 0.0
        %529 = vmatprep.subr.mxu0 0.0
        %530 = vmatpush1.msra.mxu0 0.0
        %531 = vmatprep.subr.mxu0 0.0
        %532 = vmatpush1.msra.mxu0 0.0
        %533 = vmatprep.subr.mxu0 0.0
        %534 = vmatpush1.msra.mxu0 0.0
        %535 = vmatprep.subr.mxu0 0.0
        %536 = vmatpush1.msra.mxu0 0.0
        %537 = vmatprep.subr.mxu0 0.0
        %538 = vmatpush1.msra.mxu0 0.0
        %539 = vmatprep.subr.mxu0 0.0
        %540 = vmatpush1.msra.mxu0 0.0
        %541 = vmatprep.subr.mxu0 0.0
        %542 = vmatpush1.msra.mxu0 0.0
        %543 = vmatprep.subr.mxu0 0.0
        %544 = vmatpush1.msra.mxu0 0.0
        %545 = vmatprep.subr.mxu0 0.0
        %546 = vmatpush1.msra.mxu0 0.0
        %547 = vmatprep.subr.mxu0 0.0
        %548 = vmatpush1.msra.mxu0 0.0
        %549 = vmatprep.subr.mxu0 0.0
        %550 = vmatpush1.msra.mxu0 0.0
        %551 = vmatprep.subr.mxu0 0.0
        %552 = vmatpush1.msra.mxu0 0.0
        %553 = vmatprep.subr.mxu0 0.0
        %554 = vmatpush1.msra.mxu0 0.0
        %555 = vmatprep.subr.mxu0 0.0
        %556 = vmatpush1.msra.mxu0 0.0
        %557 = vmatprep.subr.mxu0 0.0
        %558 = vmatpush1.msra.mxu0 0.0
        %559 = vmatprep.subr.mxu0 0.0
        %560 = vmatpush1.msra.mxu0 0.0
        %561 = vmatprep.subr.mxu0 0.0
        %562 = vmatpush1.msra.mxu0 0.0
        %563 = vmatprep.subr.mxu0 0.0
        %564 = vmatpush1.msra.mxu0 0.0
        %565 = vmatprep.subr.mxu0 0.0
        %566 = vmatpush1.msra.mxu0 0.0
        %567 = vmatprep.mubr.f32.mxu0 0.0
        %568 = vmatmul.mubr.f32.gmra.mrb[0].mxu0 %v492
        %v569 = vpop.f32.mrb[0].mxu0
        %v570 = vadd.f32 0.0, %v569
        %v571 = vpop.f32.mrb[0].mxu0
        %572 = vmatprep.mubr.f32.mxu0 0.0
        %573 = vmatmul.mubr.f32.gmra.mrb[0].mxu0 %v495
        %v574 = vpop.f32.mrb[0].mxu0
        %v575 = vadd.f32 0.0, %v574
        %v576 = vpop.f32.mrb[0].mxu0
        %577 = vmatprep.mubr.f32.mxu0 0.0
        %578 = vmatmul.mubr.f32.gmra.mrb[0].mxu0 %v498
        %v579 = vpop.f32.mrb[0].mxu0
        %v580 = vadd.f32 0.0, %v579
        %v581 = vpop.f32.mrb[0].mxu0
        %582 = vmatprep.mubr.f32.mxu0 0.0
        %583 = vmatmul.mubr.f32.gmra.mrb[0].mxu0 %v501
        %v584 = vpop.f32.mrb[0].mxu0
        %v585 = vadd.f32 0.0, %v584
        %v586 = vpop.f32.mrb[0].mxu0
        %587 = vdwg.mxu0
        %588 = vxpose.xlu0.b32.start [1/16] %v570, 128
        %589 = vxpose.xlu0.b32.cont [2/16] 0.0, 128
        %590 = vxpose.xlu0.b32.cont [3/16] 0.0, 128
        %591 = vxpose.xlu0.b32.cont [4/16] 0.0, 128
        %592 = vxpose.xlu0.b32.cont [5/16] 0.0, 128
        %593 = vxpose.xlu0.b32.cont [6/16] 0.0, 128
        %594 = vxpose.xlu0.b32.cont [7/16] 0.0, 128
        %595 = vxpose.xlu0.b32.cont [8/16] 0.0, 128
        %596 = vxpose.xlu0.b32.cont [9/16] 0.0, 128
        %597 = vxpose.xlu0.b32.cont [10/16] 0.0, 128
        %598 = vxpose.xlu0.b32.cont [11/16] 0.0, 128
        %599 = vxpose.xlu0.b32.cont [12/16] 0.0, 128
        %600 = vxpose.xlu0.b32.cont [13/16] 0.0, 128
        %601 = vxpose.xlu0.b32.cont [14/16] 0.0, 128
        %602 = vxpose.xlu0.b32.cont [15/16] 0.0, 128
        %603 = vxpose.xlu0.b32.end [16/16] 0.0, 128
        %v604 = vpop.trf.xlu0
        %v605 = vpop.trf.xlu0
        %v606 = vpop.trf.xlu0
        %v607 = vpop.trf.xlu0
        %v608 = vpop.trf.xlu0
        %v609 = vpop.trf.xlu0
        %v610 = vpop.trf.xlu0
        %v611 = vpop.trf.xlu0
        %v612 = vpop.trf.xlu0
        %v613 = vpop.trf.xlu0
        %v614 = vpop.trf.xlu0
        %v615 = vpop.trf.xlu0
        %v616 = vpop.trf.xlu0
        %v617 = vpop.trf.xlu0
        %v618 = vpop.trf.xlu0
        %v619 = vpop.trf.xlu0
        %620 = vxpose.xlu0.b32.start [1/16] %v575, 128
        %621 = vxpose.xlu0.b32.cont [2/16] 0.0, 128
        %622 = vxpose.xlu0.b32.cont [3/16] 0.0, 128
        %623 = vxpose.xlu0.b32.cont [4/16] 0.0, 128
        %624 = vxpose.xlu0.b32.cont [5/16] 0.0, 128
        %625 = vxpose.xlu0.b32.cont [6/16] 0.0, 128
        %626 = vxpose.xlu0.b32.cont [7/16] 0.0, 128
        %627 = vxpose.xlu0.b32.cont [8/16] 0.0, 128
        %628 = vxpose.xlu0.b32.cont [9/16] 0.0, 128
        %629 = vxpose.xlu0.b32.cont [10/16] 0.0, 128
        %630 = vxpose.xlu0.b32.cont [11/16] 0.0, 128
        %631 = vxpose.xlu0.b32.cont [12/16] 0.0, 128
        %632 = vxpose.xlu0.b32.cont [13/16] 0.0, 128
        %633 = vxpose.xlu0.b32.cont [14/16] 0.0, 128
        %634 = vxpose.xlu0.b32.cont [15/16] 0.0, 128
        %635 = vxpose.xlu0.b32.end [16/16] 0.0, 128
        %v636 = vpop.trf.xlu0
        %v637 = vpop.trf.xlu0
        %v638 = vpop.trf.xlu0
        %v639 = vpop.trf.xlu0
        %v640 = vpop.trf.xlu0
        %v641 = vpop.trf.xlu0
        %v642 = vpop.trf.xlu0
        %v643 = vpop.trf.xlu0
        %v644 = vpop.trf.xlu0
        %v645 = vpop.trf.xlu0
        %v646 = vpop.trf.xlu0
        %v647 = vpop.trf.xlu0
        %v648 = vpop.trf.xlu0
        %v649 = vpop.trf.xlu0
        %v650 = vpop.trf.xlu0
        %v651 = vpop.trf.xlu0
        %652 = vxpose.xlu0.b32.start [1/16] %v580, 128
        %653 = vxpose.xlu0.b32.cont [2/16] 0.0, 128
        %654 = vxpose.xlu0.b32.cont [3/16] 0.0, 128
        %655 = vxpose.xlu0.b32.cont [4/16] 0.0, 128
        %656 = vxpose.xlu0.b32.cont [5/16] 0.0, 128
        %657 = vxpose.xlu0.b32.cont [6/16] 0.0, 128
        %658 = vxpose.xlu0.b32.cont [7/16] 0.0, 128
        %659 = vxpose.xlu0.b32.cont [8/16] 0.0, 128
        %660 = vxpose.xlu0.b32.cont [9/16] 0.0, 128
        %661 = vxpose.xlu0.b32.cont [10/16] 0.0, 128
        %662 = vxpose.xlu0.b32.cont [11/16] 0.0, 128
        %663 = vxpose.xlu0.b32.cont [12/16] 0.0, 128
        %664 = vxpose.xlu0.b32.cont [13/16] 0.0, 128
        %665 = vxpose.xlu0.b32.cont [14/16] 0.0, 128
        %666 = vxpose.xlu0.b32.cont [15/16] 0.0, 128
        %667 = vxpose.xlu0.b32.end [16/16] 0.0, 128
        %v668 = vpop.trf.xlu0
        %v669 = vpop.trf.xlu0
        %v670 = vpop.trf.xlu0
        %v671 = vpop.trf.xlu0
        %v672 = vpop.trf.xlu0
        %v673 = vpop.trf.xlu0
        %v674 = vpop.trf.xlu0
        %v675 = vpop.trf.xlu0
        %v676 = vpop.trf.xlu0
        %v677 = vpop.trf.xlu0
        %v678 = vpop.trf.xlu0
        %v679 = vpop.trf.xlu0
        %v680 = vpop.trf.xlu0
        %v681 = vpop.trf.xlu0
        %v682 = vpop.trf.xlu0
        %v683 = vpop.trf.xlu0
        %684 = vxpose.xlu0.b32.start [1/16] %v585, 128
        %685 = vxpose.xlu0.b32.cont [2/16] 0.0, 128
        %686 = vxpose.xlu0.b32.cont [3/16] 0.0, 128
        %687 = vxpose.xlu0.b32.cont [4/16] 0.0, 128
        %688 = vxpose.xlu0.b32.cont [5/16] 0.0, 128
        %689 = vxpose.xlu0.b32.cont [6/16] 0.0, 128
        %690 = vxpose.xlu0.b32.cont [7/16] 0.0, 128
        %691 = vxpose.xlu0.b32.cont [8/16] 0.0, 128
        %692 = vxpose.xlu0.b32.cont [9/16] 0.0, 128
        %693 = vxpose.xlu0.b32.cont [10/16] 0.0, 128
        %694 = vxpose.xlu0.b32.cont [11/16] 0.0, 128
        %695 = vxpose.xlu0.b32.cont [12/16] 0.0, 128
        %696 = vxpose.xlu0.b32.cont [13/16] 0.0, 128
        %697 = vxpose.xlu0.b32.cont [14/16] 0.0, 128
        %698 = vxpose.xlu0.b32.cont [15/16] 0.0, 128
        %699 = vxpose.xlu0.b32.end [16/16] 0.0, 128
        %v700 = vpop.trf.xlu0
        %v701 = vpop.trf.xlu0
        %v702 = vpop.trf.xlu0
        %v703 = vpop.trf.xlu0
        %v704 = vpop.trf.xlu0
        %v705 = vpop.trf.xlu0
        %v706 = vpop.trf.xlu0
        %v707 = vpop.trf.xlu0
        %v708 = vpop.trf.xlu0
        %v709 = vpop.trf.xlu0
        %v710 = vpop.trf.xlu0
        %v711 = vpop.trf.xlu0
        %v712 = vpop.trf.xlu0
        %v713 = vpop.trf.xlu0
        %v714 = vpop.trf.xlu0
        %v715 = vpop.trf.xlu0
        %vm716 = vcmask 64512
        %717 = vst.msk [vmem:[%s218] sm:$0xff] %vm716, %v604
        %718 = vst.msk [vmem:[%s218 + $0x8] sm:$0xff] %vm716, %v636
        %719 = vst.msk [vmem:[%s218 + $0x10] sm:$0xff] %vm716, %v668
        %720 = vst.msk [vmem:[%s218 + $0x18] sm:$0xff] %vm716, %v700
        %s721 = sand.u32 %s97, 1
        %s722 = scalar_lea.sflag [#allocation4], %s721
        %s723 = sand.u32 %s97, 1
        %s724 = smul.addr %s723, 32
        %s725 = scalar_lea.vmem [#allocation8], %s724
        // Predicated region
        $region45: #{tpu_custom_call.1} parent=31 // pred_check
          %p726 = pneg %p107
        $region46: #{tpu_custom_call.1} parent=31 // pred_check_branch
          %728 = sbr.rel (%p726) target = $region48
        $region47: #{tpu_custom_call.1} parent=31 // pred_region
          %s729 = smul.u32 4, %s21
          %s731 = ssub.s32 512, 512
          %732 = vsyncadd %s722, %s731
          %s733 = smul.addr %s729, 128
          %s734 = scalar_lea.hbm %s3, %s733
          %s735 = sshll.u32 %s725, 4
          %s736 = int_to_ptr.vmem [resolvable:$true] %s735
          %741 = dma.vmem_to_hbm [thread:$0]  %s736, 512, %s734, %s722, 128, 128, 8
        $region48: #{tpu_custom_call.1} parent=31 // pred_fallthru
          _
      $region32: #{tpu_custom_call.1} parent=5 // pred_fallthru
        _
      %p742 = scmp.le.s32.totalorder 2, %s16
      // Predicated region
      $region49: #{tpu_custom_call.1} parent=5 // pred_check
        %p743 = pneg %p742
      $region50: #{tpu_custom_call.1} parent=5 // pred_check_branch
        %745 = sbr.rel (%p743) target = $region52
      $region51: #{tpu_custom_call.1} parent=5 // pred_region
        %s746 = ssub.s32 %s16, 2
        // Predicated region
        $region53: #{tpu_custom_call.1} parent=51 // pred_check
          %p747 = pneg %p113
        $region54: #{tpu_custom_call.1} parent=51 // pred_check_branch
          %749 = sbr.rel (%p747) target = $region56
        $region55: #{tpu_custom_call.1} parent=51 // pred_region
          %s750 = sand.u32 %s98, 1
          %s751 = scalar_lea.sflag [#allocation4], %s750
          %s752 = sand.u32 %s98, 1
          %s753 = smul.addr %s752, 32
          %s754 = scalar_lea.vmem [#allocation8], %s753
          %755 = dma.done %s751, 512
        $region56: #{tpu_custom_call.1} parent=51 // pred_fallthru
          _
      $region52: #{tpu_custom_call.1} parent=5 // pred_fallthru
        _
    $region6: #{tpu_custom_call.1} parent=1 // loop_footer
      %s20 = sadd.s32 1, %s16
    $region7: #{tpu_custom_call.1} parent=1 // loop_footer_branch
      %15 = sbr.rel target = $region3
    $region8: #{tpu_custom_call.1} parent=1 // loop_exit
      _
    %756 = vsyncpa [#allocation3], 1
    %s757 = scalar_lea.sflag [#allocation3], 1
    %758 = vsyncpa %s757, 1
    %759 = vsyncpa [#allocation6], 1
    %760 = vsyncpa [#allocation4], 1
    %s761 = scalar_lea.sflag [#allocation4], 1
    %762 = vsyncpa %s761, 1

</llo_original>
